<compile_context>
chip_gen: v7x
topology: tpu7x:2x2x1
jax: 0.10.0
libtpu: 0.0.40
codegen_flags: <defaults>
</compile_context>

<pallas_src>
import functools
import numpy as np
import jax
import jax.numpy as jnp
from jax.experimental import pallas as pl
from jax.experimental.pallas import tpu as pltpu


def _round_up(x, m):
    return ((x + m - 1) // m) * m


def _cdiv(a, b):
    return -(-a // b)


# ----------------------------------------------------------------------------
# Kernel 1: batched IoU + max/argmax over gt + in-kernel label / gt-box select.
# Lane-dense: roi coords (B, 4, N) (coords on sublanes, proposals on lanes),
# gt boxes (B, G, 5) (gts on sublanes). Output (B, 8, N):
#   row 0: max overlap, row 1: assigned gt label, rows 2..5: assigned gt coords.
# ----------------------------------------------------------------------------
def _iou_meta_kernel(rois_ref, gt_ref, meta_ref):
    r = rois_ref[0]          # (4, TN)
    g = gt_ref[0]            # (G, 5)

    rx1, ry1, rx2, ry2 = r[0:1, :], r[1:2, :], r[2:3, :], r[3:4, :]   # (1, TN)
    gx1, gy1, gx2, gy2 = g[:, 0:1], g[:, 1:2], g[:, 2:3], g[:, 3:4]   # (G, 1)
    glab = g[:, 4:5]                                                  # (G, 1)

    r_w = rx2 - rx1 + 1.0
    r_h = ry2 - ry1 + 1.0
    g_w = gx2 - gx1 + 1.0
    g_h = gy2 - gy1 + 1.0
    r_area = r_w * r_h       # (1, TN)
    g_area = g_w * g_h       # (G, 1)

    iw = jnp.maximum(jnp.minimum(rx2, gx2) - jnp.maximum(rx1, gx1) + 1.0, 0.0)
    ih = jnp.maximum(jnp.minimum(ry2, gy2) - jnp.maximum(ry1, gy1) + 1.0, 0.0)
    inter = iw * ih                                                   # (G, TN)
    # ua >= 1 for well-formed boxes; the clamp only guards degenerate inputs
    # against Inf out of the approx reciprocal.
    ua = jnp.maximum(r_area + g_area - inter, 1.0)
    # deliberate: approx reciprocal runs on the otherwise-idle EUP slot (~2^-12 rel err).
    ov = inter * pl.reciprocal(ua, approx=True)

    # zero-area handling (matches bbox_overlaps_batch semantics; gt mask first)
    g_zero = (g_w == 1.0) & (g_h == 1.0)                              # (G, 1)
    r_zero = (r_w == 1.0) & (r_h == 1.0)                              # (1, TN)
    ov = jnp.where(g_zero, 0.0, ov)
    ov = jnp.where(r_zero, -1.0, ov)

    G_, TN = ov.shape
    max_v = jnp.max(ov, axis=0, keepdims=True)                        # (1, TN)
    row = jax.lax.broadcasted_iota(jnp.int32, (G_, TN), 0)
    assign = jnp.min(jnp.where(ov == max_v, row, G_), axis=0, keepdims=True)
    sel = (row == assign).astype(jnp.float32)      # (G, TN) one-hot over gts

    lab = jnp.sum(sel * glab, axis=0, keepdims=True)                  # (1, TN)
    agx1 = jnp.sum(sel * gx1, axis=0, keepdims=True)
    agy1 = jnp.sum(sel * gy1, axis=0, keepdims=True)
    agx2 = jnp.sum(sel * gx2, axis=0, keepdims=True)
    agy2 = jnp.sum(sel * gy2, axis=0, keepdims=True)
    zero = jnp.zeros_like(max_v)

    meta_ref[0] = jnp.concatenate(
        [max_v, lab, agx1, agy1, agx2, agy2, zero, zero], axis=0)     # (8, TN)


def iou_meta(roi_t, gt_boxes, tile_n_max=2048):
    """roi_t: (B, 4, N) f32, gt_boxes: (B, G, 5) f32 -> meta (B, 8, N) f32."""
    B, _, N = roi_t.shape
    G = gt_boxes.shape[1]

    # pad N to a multiple of 128 first, then pick a 128-aligned divisor tile.
    n_pad128 = _round_up(N, 128)
    n_tiles = max(1, _cdiv(n_pad128, tile_n_max))
    if B * n_tiles < 2 and n_pad128 >= 256:
        n_tiles = 2                      # v7x: keep >= 2 grid points for the 2 TCs
    tn = _round_up(_cdiv(n_pad128, n_tiles), 128)
    n_pad = tn * n_tiles

    if n_pad != N:
        # zero boxes -> w == h == 1 -> ov forced to -1; padded lanes sliced off below.
        roi_t = jnp.pad(roi_t, ((0, 0), (0, 0), (0, n_pad - N)))

    meta = pl.pallas_call(
        _iou_meta_kernel,
        out_shape=jax.ShapeDtypeStruct((B, 8, n_pad), jnp.float32),
        grid=(B, n_tiles),
        in_specs=[pl.BlockSpec((1, 4, tn), lambda b, n: (b, 0, n)),
                  pl.BlockSpec((1, G, 5), lambda b, n: (b, 0, 0))],
        out_specs=pl.BlockSpec((1, 8, tn), lambda b, n: (b, 0, n)),
        compiler_params=pltpu.CompilerParams(
            dimension_semantics=("parallel", "parallel")),
    )(roi_t, gt_boxes)
    return meta[:, :, :N]


# ----------------------------------------------------------------------------
# Kernel 2: bbox-target encode + normalize + bg masking.
# Single gridless step, batch folded into the lane axis: (4, B*P) lane-dense.
# ----------------------------------------------------------------------------
def _make_bbox_target_kernel(means, inv_stds):
    m = [float(v) for v in means]
    s = [float(v) for v in inv_stds]

    def kernel(ex_ref, gt_ref, lbl_ref, out_ref):
        ex = ex_ref[...]     # (4, M)
        gt = gt_ref[...]     # (4, M)

        ex_w = ex[2:3, :] - ex[0:1, :] + 1.0
        ex_h = ex[3:4, :] - ex[1:2, :] + 1.0
        inv_w = pl.reciprocal(ex_w)      # exact; computed once, reused for dx & dw
        inv_h = pl.reciprocal(ex_h)
        ex_cx = ex[0:1, :] + 0.5 * ex_w
        ex_cy = ex[1:2, :] + 0.5 * ex_h

        gt_w = gt[2:3, :] - gt[0:1, :] + 1.0
        gt_h = gt[3:4, :] - gt[1:2, :] + 1.0
        gt_cx = gt[0:1, :] + 0.5 * gt_w
        gt_cy = gt[1:2, :] + 0.5 * gt_h

        dx = ((gt_cx - ex_cx) * inv_w - m[0]) * s[0]
        dy = ((gt_cy - ex_cy) * inv_h - m[1]) * s[1]
        dw = (jnp.log(gt_w * inv_w) - m[2]) * s[2]
        dh = (jnp.log(gt_h * inv_h) - m[3]) * s[3]

        t = jnp.concatenate([dx, dy, dw, dh], axis=0)                 # (4, M)
        mask = lbl_ref[...] > 0.0                                     # (1, M)
        out_ref[...] = jnp.where(mask, t, 0.0)

    return kernel


def bbox_regression_targets(ex_t, gt_t, labels, means, stds):
    """ex_t/gt_t: (4, B, P) f32, labels: (B, P) f32 -> (B, P, 4) f32."""
    _, B, P = ex_t.shape
    M = B * P
    m_pad = _round_up(M, 128)

    ex_f = ex_t.reshape(4, M)
    gt_f = gt_t.reshape(4, M)
    lbl_f = labels.reshape(1, M)
    if m_pad != M:
        pad = ((0, 0), (0, m_pad - M))
        ex_f = jnp.pad(ex_f, pad)       # zero pads -> w == h == 1, log(1) = 0, label 0
        gt_f = jnp.pad(gt_f, pad)
        lbl_f = jnp.pad(lbl_f, pad)

    kernel = _make_bbox_target_kernel(means, [1.0 / float(v) for v in stds])
    out = pl.pallas_call(
        kernel,
        out_shape=jax.ShapeDtypeStruct((4, m_pad), jnp.float32),
    )(ex_f, gt_f, lbl_f)
    return jnp.transpose(out[:, :M].reshape(4, B, P), (1, 2, 0))      # (B, P, 4)


# ----------------------------------------------------------------------------
# fg/bg sampling for a single image (vmapped over the batch).
# Single composite-key argsort per image: fg in random order first, then bg
# (ascending index), then everything else.
# ----------------------------------------------------------------------------
def _sample_rois_one(mo, labels_i, rois_i, roi_t_i, gt_t_i, key, batch_idx,
                     *, fg_thresh, bg_hi, bg_lo, P, F):
    N = mo.shape[0]
    idxN = jnp.arange(N, dtype=jnp.int32)
    j = jnp.arange(P, dtype=jnp.int32)
    k1, k2, k3 = jax.random.split(key, 3)

    fg_mask = mo >= fg_thresh
    bg_mask = (mo < bg_hi) & (mo >= bg_lo)
    num_fg = jnp.sum(fg_mask).astype(jnp.int32)
    num_bg = jnp.sum(bg_mask).astype(jnp.int32)

    # one argsort on a composite key: fg keys in [0,1) (random order), bg keys in
    # [2, 2+N) (ascending index), the rest in [2+N, ...).
    pri = jax.random.uniform(k1, (N,))
    idx_f = idxN.astype(jnp.float32)
    keyf = jnp.where(fg_mask, pri,
                     jnp.where(bg_mask, 2.0 + idx_f, 2.0 + float(N) + idx_f))
    perm = jnp.argsort(keyf).astype(jnp.int32)        # (N,)

    # TODO(synk): the reference raises ValueError when num_fg == 0 and num_bg == 0;
    # that cannot be raised on traced data, inputs must avoid this case.
    num_fg_this = jnp.where(
        num_fg > 0,
        jnp.where(num_bg > 0, jnp.minimum(F, num_fg), P),
        0).astype(jnp.int32)

    u_fg = jax.random.uniform(k2, (P,))
    u_bg = jax.random.uniform(k3, (P,))
    fg_rep = jnp.clip(jnp.floor(u_fg * jnp.maximum(num_fg, 1)).astype(jnp.int32),
                      0, jnp.maximum(num_fg - 1, 0))
    bg_rep = jnp.clip(jnp.floor(u_bg * jnp.maximum(num_bg, 1)).astype(jnp.int32),
                      0, jnp.maximum(num_bg - 1, 0))

    fg_seq = perm[jnp.minimum(j, N - 1)]                              # random fg prefix
    fg_pick = jnp.where(num_bg > 0, fg_seq, perm[fg_rep])
    bg_pick = perm[jnp.minimum(num_fg + bg_rep, N - 1)]
    keep = jnp.where(j < num_fg_this, fg_pick, bg_pick)               # (P,)

    lbls = labels_i[keep]
    lbls = jnp.where(j < num_fg_this, lbls, 0.0)
    rois_out = rois_i[keep].at[:, 0].set(batch_idx.astype(jnp.float32))   # (P, 5)
    ex_t = roi_t_i[:, keep]                                           # (4, P) lane-dense
    gt_t = gt_t_i[:, keep]                                            # (4, P) lane-dense
    return rois_out, lbls, ex_t, gt_t


# ----------------------------------------------------------------------------
# Module wrapper (mirrors buildProposalTargetLayer)
# ----------------------------------------------------------------------------
class BuildProposalTargetLayer:
    def __init__(self, mode, cfg):
        self.mode = mode
        self.cfg = cfg
        if mode == 'TRAIN':
            p = 'TRAIN'
        elif mode == 'TEST':
            p = 'TEST'
        else:
            raise ValueError('Unkown mode <%s> in buildProposalTargetLayer...' % mode)
        self.bbox_normalize_means = tuple(float(x) for x in cfg[p + '_BBOX_NORMALIZE_MEANS'])
        self.bbox_normalize_stds = tuple(float(x) for x in cfg[p + '_BBOX_NORMALIZE_STDS'])
        self.roi_batchsize = cfg[p + '_ROI_BATCHSIZE']
        self.roi_fg_fraction = cfg[p + '_ROI_FG_FRACTION']
        self.roi_fg_thresh = cfg[p + '_ROI_FG_THRESH']
        self.roi_bg_thresh_hi = cfg[p + '_ROI_BG_THRESH_HI']
        self.roi_bg_thresh_lo = cfg[p + '_ROI_BG_THRESH_LO']
        self._forward_jit = jax.jit(self._forward_impl)

    def _forward_impl(self, all_rois, gt_boxes, rng_key):
        all_rois = all_rois.astype(jnp.float32)
        gt_boxes = gt_boxes.astype(jnp.float32)

        # append gt boxes as extra rois (batch-idx column = 0, matching the reference)
        gt_append = jnp.zeros_like(gt_boxes).at[..., 1:5].set(gt_boxes[..., :4])
        all_rois = jnp.concatenate([all_rois, gt_append], axis=1)     # (B, N, 5)

        P = self.roi_batchsize
        F = int(np.round(self.roi_fg_fraction * P))
        B = all_rois.shape[0]

        # lane-dense roi coord slab, reused by kernel 1 and the sampler gathers
        roi_t = jnp.transpose(all_rois[..., 1:5], (0, 2, 1))          # (B, 4, N)

        # --- hot path 1: IoU + max/argmax + label + assigned-gt select (Pallas) ---
        meta = iou_meta(roi_t, gt_boxes)                              # (B, 8, N)
        max_ov = meta[:, 0, :]                                        # (B, N)
        labels_all = meta[:, 1, :]                                    # (B, N)
        gt_assigned_t = meta[:, 2:6, :]                               # (B, 4, N)

        # --- fg/bg sampling (data-dependent glue; jax.random stands in for np.random) ---
        keys = jax.random.split(rng_key, B)
        batch_ids = jnp.arange(B, dtype=jnp.int32)
        sample_fn = functools.partial(
            _sample_rois_one,
            fg_thresh=self.roi_fg_thresh, bg_hi=self.roi_bg_thresh_hi,
            bg_lo=self.roi_bg_thresh_lo, P=P, F=F)
        rois_batch, labels_batch, ex_t, gt_t = jax.vmap(
            sample_fn, in_axes=(0, 0, 0, 0, 0, 0, 0), out_axes=(0, 0, 1, 1))(
            max_ov, labels_all, all_rois, roi_t, gt_assigned_t, keys, batch_ids)

        # --- hot path 2: encode + normalize + mask (Pallas, single step, lane-dense) ---
        bbox_targets = bbox_regression_targets(
            ex_t, gt_t, labels_batch,
            self.bbox_normalize_means, self.bbox_normalize_stds)

        return rois_batch, labels_batch, bbox_targets

    def forward(self, all_rois, gt_boxes, num_gt_boxes, rng_key):
        del num_gt_boxes  # unused by the reference forward as well
        return self._forward_jit(all_rois, gt_boxes, rng_key)

    __call__ = forward


# ----------------------------------------------------------------------------
if __name__ == "__main__":
    cfg = {
        'TRAIN_BBOX_NORMALIZE_MEANS': (0.0, 0.0, 0.0, 0.0),
        'TRAIN_BBOX_NORMALIZE_STDS': (0.1, 0.1, 0.2, 0.2),
        'TRAIN_ROI_BATCHSIZE': 8,
        'TRAIN_ROI_FG_FRACTION': 0.25,
        'TRAIN_ROI_FG_THRESH': 0.5,
        'TRAIN_ROI_BG_THRESH_HI': 0.5,
        'TRAIN_ROI_BG_THRESH_LO': 0.0,
    }

    key = jax.random.PRNGKey(0)
    B, R, G = 2, 12, 4
    kxy, kwh, klab, krxy, krwh, ksample = jax.random.split(key, 6)

    # ground-truth boxes (x1,y1,x2,y2,label)
    xy = jax.random.uniform(kxy, (B, G, 2), minval=0.0, maxval=40.0)
    wh = jax.random.uniform(kwh, (B, G, 2), minval=8.0, maxval=24.0)
    lab = jax.random.randint(klab, (B, G, 1), 1, 6).astype(jnp.float32)
    gt_boxes = jnp.concatenate([xy, xy + wh, lab], axis=-1).astype(jnp.float32)

    # proposals (batch_idx, x1, y1, x2, y2)
    rxy = jax.random.uniform(krxy, (B, R, 2), minval=0.0, maxval=48.0)
    rwh = jax.random.uniform(krwh, (B, R, 2), minval=4.0, maxval=20.0)
    all_rois = jnp.concatenate(
        [jnp.zeros((B, R, 1), jnp.float32), rxy, rxy + rwh], axis=-1).astype(jnp.float32)

    num_gt_boxes = jnp.full((B,), G, dtype=jnp.int32)

    layer = BuildProposalTargetLayer('TRAIN', cfg)
    rois, labels, bbox_targets = layer(all_rois, gt_boxes, num_gt_boxes, ksample)
    jax.block_until_ready((rois, labels, bbox_targets))

    assert rois.shape == (B, cfg['TRAIN_ROI_BATCHSIZE'], 5)
    assert labels.shape == (B, cfg['TRAIN_ROI_BATCHSIZE'])
    assert bbox_targets.shape == (B, cfg['TRAIN_ROI_BATCHSIZE'], 4)
    print("KERNEL_OK")
</pallas_src>

<mosaic_0001>
module attributes {stable_mosaic.version = 11 : i64} {
  func.func @_iou_meta_kernel(%arg0: i32, %arg1: i32, %arg2: memref<1x4x128xf32, #tpu.memory_space<vmem>>, %arg3: memref<1x4x5xf32, #tpu.memory_space<vmem>>, %arg4: memref<1x8x128xf32, #tpu.memory_space<vmem>>) attributes {dimension_semantics = [#tpu.dimension_semantics<parallel>, #tpu.dimension_semantics<parallel>], iteration_bounds = array<i64: 2, 1>, scalar_prefetch = 0 : i64, scratch_operands = 0 : i64, tpu.core_type = #tpu.core_type<tc>, window_params = [{transform_indices = @transform_0, window_bounds = array<i64: 1, 4, 128>}, {transform_indices = @transform_1, window_bounds = array<i64: 1, 4, 5>}, {transform_indices = @transform_2, window_bounds = array<i64: 1, 8, 128>}]} {
    %c0 = arith.constant 0 : index
    %c0_0 = arith.constant 0 : index
    %c0_1 = arith.constant 0 : index
    %0 = vector.load %arg2[%c0, %c0_0, %c0_1] : memref<1x4x128xf32, #tpu.memory_space<vmem>>, vector<1x4x128xf32>
    %1 = vector.shape_cast %0 : vector<1x4x128xf32> to vector<4x128xf32>
    %c0_2 = arith.constant 0 : index
    %c0_3 = arith.constant 0 : index
    %c0_4 = arith.constant 0 : index
    %2 = vector.load %arg3[%c0_2, %c0_3, %c0_4] : memref<1x4x5xf32, #tpu.memory_space<vmem>>, vector<1x4x5xf32>
    %3 = vector.shape_cast %2 : vector<1x4x5xf32> to vector<4x5xf32>
    %4 = vector.extract_strided_slice %1 {offsets = [0, 0], sizes = [1, 128], strides = [1, 1]} : vector<4x128xf32> to vector<1x128xf32>
    %5 = vector.extract_strided_slice %1 {offsets = [1, 0], sizes = [1, 128], strides = [1, 1]} : vector<4x128xf32> to vector<1x128xf32>
    %6 = vector.extract_strided_slice %1 {offsets = [2, 0], sizes = [1, 128], strides = [1, 1]} : vector<4x128xf32> to vector<1x128xf32>
    %7 = vector.extract_strided_slice %1 {offsets = [3, 0], sizes = [1, 128], strides = [1, 1]} : vector<4x128xf32> to vector<1x128xf32>
    %8 = vector.extract_strided_slice %3 {offsets = [0, 0], sizes = [4, 1], strides = [1, 1]} : vector<4x5xf32> to vector<4x1xf32>
    %9 = vector.extract_strided_slice %3 {offsets = [0, 1], sizes = [4, 1], strides = [1, 1]} : vector<4x5xf32> to vector<4x1xf32>
    %10 = vector.extract_strided_slice %3 {offsets = [0, 2], sizes = [4, 1], strides = [1, 1]} : vector<4x5xf32> to vector<4x1xf32>
    %11 = vector.extract_strided_slice %3 {offsets = [0, 3], sizes = [4, 1], strides = [1, 1]} : vector<4x5xf32> to vector<4x1xf32>
    %12 = vector.extract_strided_slice %3 {offsets = [0, 4], sizes = [4, 1], strides = [1, 1]} : vector<4x5xf32> to vector<4x1xf32>
    %13 = arith.subf %6, %4 : vector<1x128xf32>
    %cst = arith.constant 1.000000e+00 : f32
    %14 = vector.broadcast %cst : f32 to vector<1x128xf32>
    %15 = arith.addf %13, %14 : vector<1x128xf32>
    %16 = arith.subf %7, %5 : vector<1x128xf32>
    %cst_5 = arith.constant 1.000000e+00 : f32
    %17 = vector.broadcast %cst_5 : f32 to vector<1x128xf32>
    %18 = arith.addf %16, %17 : vector<1x128xf32>
    %19 = arith.subf %10, %8 : vector<4x1xf32>
    %cst_6 = arith.constant 1.000000e+00 : f32
    %20 = vector.broadcast %cst_6 : f32 to vector<4x1xf32>
    %21 = arith.addf %19, %20 : vector<4x1xf32>
    %22 = arith.subf %11, %9 : vector<4x1xf32>
    %cst_7 = arith.constant 1.000000e+00 : f32
    %23 = vector.broadcast %cst_7 : f32 to vector<4x1xf32>
    %24 = arith.addf %22, %23 : vector<4x1xf32>
    %25 = arith.mulf %15, %18 : vector<1x128xf32>
    %26 = arith.mulf %21, %24 : vector<4x1xf32>
    %27 = vector.broadcast %6 : vector<1x128xf32> to vector<4x128xf32>
    %28 = vector.broadcast %10 : vector<4x1xf32> to vector<4x128xf32>
    %29 = arith.minimumf %27, %28 : vector<4x128xf32>
    %30 = vector.broadcast %4 : vector<1x128xf32> to vector<4x128xf32>
    %31 = vector.broadcast %8 : vector<4x1xf32> to vector<4x128xf32>
    %32 = arith.maximumf %30, %31 : vector<4x128xf32>
    %33 = arith.subf %29, %32 : vector<4x128xf32>
    %cst_8 = arith.constant 1.000000e+00 : f32
    %34 = vector.broadcast %cst_8 : f32 to vector<4x128xf32>
    %35 = arith.addf %33, %34 : vector<4x128xf32>
    %cst_9 = arith.constant 0.000000e+00 : f32
    %36 = vector.broadcast %cst_9 : f32 to vector<4x128xf32>
    %37 = arith.maximumf %35, %36 : vector<4x128xf32>
    %38 = vector.broadcast %7 : vector<1x128xf32> to vector<4x128xf32>
    %39 = vector.broadcast %11 : vector<4x1xf32> to vector<4x128xf32>
    %40 = arith.minimumf %38, %39 : vector<4x128xf32>
    %41 = vector.broadcast %5 : vector<1x128xf32> to vector<4x128xf32>
    %42 = vector.broadcast %9 : vector<4x1xf32> to vector<4x128xf32>
    %43 = arith.maximumf %41, %42 : vector<4x128xf32>
    %44 = arith.subf %40, %43 : vector<4x128xf32>
    %cst_10 = arith.constant 1.000000e+00 : f32
    %45 = vector.broadcast %cst_10 : f32 to vector<4x128xf32>
    %46 = arith.addf %44, %45 : vector<4x128xf32>
    %cst_11 = arith.constant 0.000000e+00 : f32
    %47 = vector.broadcast %cst_11 : f32 to vector<4x128xf32>
    %48 = arith.maximumf %46, %47 : vector<4x128xf32>
    %49 = arith.mulf %37, %48 : vector<4x128xf32>
    %50 = vector.broadcast %25 : vector<1x128xf32> to vector<4x128xf32>
    %51 = vector.broadcast %26 : vector<4x1xf32> to vector<4x128xf32>
    %52 = arith.addf %50, %51 : vector<4x128xf32>
    %53 = arith.subf %52, %49 : vector<4x128xf32>
    %cst_12 = arith.constant 1.000000e+00 : f32
    %54 = vector.broadcast %cst_12 : f32 to vector<4x128xf32>
    %55 = arith.maximumf %53, %54 : vector<4x128xf32>
    %56 = tpu.reciprocal %55 {approx = true} : vector<4x128xf32> -> vector<4x128xf32>
    %57 = arith.mulf %49, %56 : vector<4x128xf32>
    %cst_13 = arith.constant 1.000000e+00 : f32
    %58 = vector.broadcast %cst_13 : f32 to vector<4x1xf32>
    %59 = arith.cmpf oeq, %21, %58 : vector<4x1xf32>
    %cst_14 = arith.constant 1.000000e+00 : f32
    %60 = vector.broadcast %cst_14 : f32 to vector<4x1xf32>
    %61 = arith.cmpf oeq, %24, %60 : vector<4x1xf32>
    %62 = arith.andi %59, %61 : vector<4x1xi1>
    %cst_15 = arith.constant 1.000000e+00 : f32
    %63 = vector.broadcast %cst_15 : f32 to vector<1x128xf32>
    %64 = arith.cmpf oeq, %15, %63 : vector<1x128xf32>
    %cst_16 = arith.constant 1.000000e+00 : f32
    %65 = vector.broadcast %cst_16 : f32 to vector<1x128xf32>
    %66 = arith.cmpf oeq, %18, %65 : vector<1x128xf32>
    %67 = arith.andi %64, %66 : vector<1x128xi1>
    %cst_17 = arith.constant 0.000000e+00 : f32
    %68 = vector.shape_cast %62 : vector<4x1xi1> to vector<4x1xi1>
    %69 = vector.broadcast %68 : vector<4x1xi1> to vector<4x128xi1>
    %70 = vector.broadcast %cst_17 : f32 to vector<4x128xf32>
    %71 = arith.select %69, %70, %57 : vector<4x128xi1>, vector<4x128xf32>
    %cst_18 = arith.constant -1.000000e+00 : f32
    %72 = vector.shape_cast %67 : vector<1x128xi1> to vector<1x128xi1>
    %73 = vector.broadcast %72 : vector<1x128xi1> to vector<4x128xi1>
    %74 = vector.broadcast %cst_18 : f32 to vector<4x128xf32>
    %75 = arith.select %73, %74, %71 : vector<4x128xi1>, vector<4x128xf32>
    %cst_19 = arith.constant dense<0xFF800000> : vector<128xf32>
    %76 = vector.multi_reduction <maximumf>, %75, %cst_19 [0] : vector<4x128xf32> to vector<128xf32>
    %77 = vector.shape_cast %76 : vector<128xf32> to vector<1x128xf32>
    %78 = tpu.iota {dimensions = array<i32: 0>} : vector<4x128xi32>
    %79 = vector.broadcast %77 : vector<1x128xf32> to vector<4x128xf32>
    %80 = arith.cmpf oeq, %75, %79 : vector<4x128xf32>
    %c4_i32 = arith.constant 4 : i32
    %81 = vector.broadcast %c4_i32 : i32 to vector<4x128xi32>
    %82 = arith.select %80, %78, %81 : vector<4x128xi1>, vector<4x128xi32>
    %cst_20 = arith.constant dense<2147483647> : vector<128xi32>
    %83 = vector.multi_reduction <minsi>, %82, %cst_20 [0] : vector<4x128xi32> to vector<128xi32>
    %84 = vector.shape_cast %83 : vector<128xi32> to vector<1x128xi32>
    %85 = vector.broadcast %84 : vector<1x128xi32> to vector<4x128xi32>
    %86 = arith.cmpi eq, %78, %85 : vector<4x128xi32>
    %87 = arith.extui %86 : vector<4x128xi1> to vector<4x128xi32>
    %88 = arith.sitofp %87 : vector<4x128xi32> to vector<4x128xf32>
    %89 = vector.broadcast %12 : vector<4x1xf32> to vector<4x128xf32>
    %90 = arith.mulf %88, %89 : vector<4x128xf32>
    %cst_21 = arith.constant dense<0.000000e+00> : vector<128xf32>
    %91 = vector.multi_reduction <add>, %90, %cst_21 [0] : vector<4x128xf32> to vector<128xf32>
    %92 = vector.shape_cast %91 : vector<128xf32> to vector<1x128xf32>
    %93 = vector.broadcast %8 : vector<4x1xf32> to vector<4x128xf32>
    %94 = arith.mulf %88, %93 : vector<4x128xf32>
    %cst_22 = arith.constant dense<0.000000e+00> : vector<128xf32>
    %95 = vector.multi_reduction <add>, %94, %cst_22 [0] : vector<4x128xf32> to vector<128xf32>
    %96 = vector.shape_cast %95 : vector<128xf32> to vector<1x128xf32>
    %97 = vector.broadcast %9 : vector<4x1xf32> to vector<4x128xf32>
    %98 = arith.mulf %88, %97 : vector<4x128xf32>
    %cst_23 = arith.constant dense<0.000000e+00> : vector<128xf32>
    %99 = vector.multi_reduction <add>, %98, %cst_23 [0] : vector<4x128xf32> to vector<128xf32>
    %100 = vector.shape_cast %99 : vector<128xf32> to vector<1x128xf32>
    %101 = vector.broadcast %10 : vector<4x1xf32> to vector<4x128xf32>
    %102 = arith.mulf %88, %101 : vector<4x128xf32>
    %cst_24 = arith.constant dense<0.000000e+00> : vector<128xf32>
    %103 = vector.multi_reduction <add>, %102, %cst_24 [0] : vector<4x128xf32> to vector<128xf32>
    %104 = vector.shape_cast %103 : vector<128xf32> to vector<1x128xf32>
    %105 = vector.broadcast %11 : vector<4x1xf32> to vector<4x128xf32>
    %106 = arith.mulf %88, %105 : vector<4x128xf32>
    %cst_25 = arith.constant dense<0.000000e+00> : vector<128xf32>
    %107 = vector.multi_reduction <add>, %106, %cst_25 [0] : vector<4x128xf32> to vector<128xf32>
    %108 = vector.shape_cast %107 : vector<128xf32> to vector<1x128xf32>
    %cst_26 = arith.constant 0.000000e+00 : f32
    %109 = vector.broadcast %cst_26 : f32 to vector<1x128xf32>
    %110 = tpu.concatenate %77, %92, %96, %100, %104, %108, %109, %109 in 0 : vector<1x128xf32>, vector<1x128xf32>, vector<1x128xf32>, vector<1x128xf32>, vector<1x128xf32>, vector<1x128xf32>, vector<1x128xf32>, vector<1x128xf32> -> vector<8x128xf32>
    %c0_27 = arith.constant 0 : index
    %c0_28 = arith.constant 0 : index
    %c0_29 = arith.constant 0 : index
    %111 = vector.load %arg4[%c0_27, %c0_28, %c0_29] : memref<1x8x128xf32, #tpu.memory_space<vmem>>, vector<1x8x128xf32>
    %112 = vector.shape_cast %111 : vector<1x8x128xf32> to vector<8x128xf32>
    %113 = vector.shape_cast %110 : vector<8x128xf32> to vector<1x8x128xf32>
    tpu.vector_store %arg4[%c0_27, %c0_28, %c0_29], %113 {strides = array<i32>} : memref<1x8x128xf32, #tpu.memory_space<vmem>>, vector<1x8x128xf32>,
    return
  }
  func.func @transform_0(%arg0: i32, %arg1: i32) -> (i32, i32, i32) {
    %c0_i32 = arith.constant 0 : i32
    %c0_i32_0 = arith.constant 0 : i32
    return %arg0, %c0_i32, %arg1 : i32, i32, i32
  }
  func.func @transform_1(%arg0: i32, %arg1: i32) -> (i32, i32, i32) {
    %c0_i32 = arith.constant 0 : i32
    %c0_i32_0 = arith.constant 0 : i32
    %c0_i32_1 = arith.constant 0 : i32
    return %arg0, %c0_i32, %c0_i32_0 : i32, i32, i32
  }
  func.func @transform_2(%arg0: i32, %arg1: i32) -> (i32, i32, i32) {
    %c0_i32 = arith.constant 0 : i32
    %c0_i32_0 = arith.constant 0 : i32
    return %arg0, %c0_i32, %arg1 : i32, i32, i32
  }
}

module attributes {stable_mosaic.version = 11 : i64} {
  func.func @kernel(%arg0: memref<4x128xf32, #tpu.memory_space<vmem>>, %arg1: memref<4x128xf32, #tpu.memory_space<vmem>>, %arg2: memref<1x128xf32, #tpu.memory_space<vmem>>, %arg3: memref<4x128xf32, #tpu.memory_space<vmem>>) attributes {dimension_semantics = [], scalar_prefetch = 0 : i64, scratch_operands = 0 : i64, tpu.core_type = #tpu.core_type<tc>} {
    %c0 = arith.constant 0 : index
    %c0_0 = arith.constant 0 : index
    %0 = vector.load %arg0[%c0, %c0_0] : memref<4x128xf32, #tpu.memory_space<vmem>>, vector<4x128xf32>
    %c0_1 = arith.constant 0 : index
    %c0_2 = arith.constant 0 : index
    %1 = vector.load %arg1[%c0_1, %c0_2] : memref<4x128xf32, #tpu.memory_space<vmem>>, vector<4x128xf32>
    %2 = vector.extract_strided_slice %0 {offsets = [2, 0], sizes = [1, 128], strides = [1, 1]} : vector<4x128xf32> to vector<1x128xf32>
    %3 = vector.extract_strided_slice %0 {offsets = [0, 0], sizes = [1, 128], strides = [1, 1]} : vector<4x128xf32> to vector<1x128xf32>
    %4 = arith.subf %2, %3 : vector<1x128xf32>
    %cst = arith.constant 1.000000e+00 : f32
    %5 = vector.broadcast %cst : f32 to vector<1x128xf32>
    %6 = arith.addf %4, %5 : vector<1x128xf32>
    %7 = vector.extract_strided_slice %0 {offsets = [3, 0], sizes = [1, 128], strides = [1, 1]} : vector<4x128xf32> to vector<1x128xf32>
    %8 = vector.extract_strided_slice %0 {offsets = [1, 0], sizes = [1, 128], strides = [1, 1]} : vector<4x128xf32> to vector<1x128xf32>
    %9 = arith.subf %7, %8 : vector<1x128xf32>
    %cst_3 = arith.constant 1.000000e+00 : f32
    %10 = vector.broadcast %cst_3 : f32 to vector<1x128xf32>
    %11 = arith.addf %9, %10 : vector<1x128xf32>
    %12 = tpu.reciprocal %6 : vector<1x128xf32> -> vector<1x128xf32>
    %13 = tpu.reciprocal %11 : vector<1x128xf32> -> vector<1x128xf32>
    %14 = vector.extract_strided_slice %0 {offsets = [0, 0], sizes = [1, 128], strides = [1, 1]} : vector<4x128xf32> to vector<1x128xf32>
    %cst_4 = arith.constant 5.000000e-01 : f32
    %15 = vector.broadcast %cst_4 : f32 to vector<1x128xf32>
    %16 = arith.mulf %15, %6 : vector<1x128xf32>
    %17 = arith.addf %14, %16 : vector<1x128xf32>
    %18 = vector.extract_strided_slice %0 {offsets = [1, 0], sizes = [1, 128], strides = [1, 1]} : vector<4x128xf32> to vector<1x128xf32>
    %cst_5 = arith.constant 5.000000e-01 : f32
    %19 = vector.broadcast %cst_5 : f32 to vector<1x128xf32>
    %20 = arith.mulf %19, %11 : vector<1x128xf32>
    %21 = arith.addf %18, %20 : vector<1x128xf32>
    %22 = vector.extract_strided_slice %1 {offsets = [2, 0], sizes = [1, 128], strides = [1, 1]} : vector<4x128xf32> to vector<1x128xf32>
    %23 = vector.extract_strided_slice %1 {offsets = [0, 0], sizes = [1, 128], strides = [1, 1]} : vector<4x128xf32> to vector<1x128xf32>
    %24 = arith.subf %22, %23 : vector<1x128xf32>
    %cst_6 = arith.constant 1.000000e+00 : f32
    %25 = vector.broadcast %cst_6 : f32 to vector<1x128xf32>
    %26 = arith.addf %24, %25 : vector<1x128xf32>
    %27 = vector.extract_strided_slice %1 {offsets = [3, 0], sizes = [1, 128], strides = [1, 1]} : vector<4x128xf32> to vector<1x128xf32>
    %28 = vector.extract_strided_slice %1 {offsets = [1, 0], sizes = [1, 128], strides = [1, 1]} : vector<4x128xf32> to vector<1x128xf32>
    %29 = arith.subf %27, %28 : vector<1x128xf32>
    %cst_7 = arith.constant 1.000000e+00 : f32
    %30 = vector.broadcast %cst_7 : f32 to vector<1x128xf32>
    %31 = arith.addf %29, %30 : vector<1x128xf32>
    %32 = vector.extract_strided_slice %1 {offsets = [0, 0], sizes = [1, 128], strides = [1, 1]} : vector<4x128xf32> to vector<1x128xf32>
    %cst_8 = arith.constant 5.000000e-01 : f32
    %33 = vector.broadcast %cst_8 : f32 to vector<1x128xf32>
    %34 = arith.mulf %33, %26 : vector<1x128xf32>
    %35 = arith.addf %32, %34 : vector<1x128xf32>
    %36 = vector.extract_strided_slice %1 {offsets = [1, 0], sizes = [1, 128], strides = [1, 1]} : vector<4x128xf32> to vector<1x128xf32>
    %cst_9 = arith.constant 5.000000e-01 : f32
    %37 = vector.broadcast %cst_9 : f32 to vector<1x128xf32>
    %38 = arith.mulf %37, %31 : vector<1x128xf32>
    %39 = arith.addf %36, %38 : vector<1x128xf32>
    %40 = arith.subf %35, %17 : vector<1x128xf32>
    %41 = arith.mulf %40, %12 : vector<1x128xf32>
    %cst_10 = arith.constant 0.000000e+00 : f32
    %42 = vector.broadcast %cst_10 : f32 to vector<1x128xf32>
    %43 = arith.subf %41, %42 : vector<1x128xf32>
    %cst_11 = arith.constant 1.000000e+01 : f32
    %44 = vector.broadcast %cst_11 : f32 to vector<1x128xf32>
    %45 = arith.mulf %43, %44 : vector<1x128xf32>
    %46 = arith.subf %39, %21 : vector<1x128xf32>
    %47 = arith.mulf %46, %13 : vector<1x128xf32>
    %cst_12 = arith.constant 0.000000e+00 : f32
    %48 = vector.broadcast %cst_12 : f32 to vector<1x128xf32>
    %49 = arith.subf %47, %48 : vector<1x128xf32>
    %cst_13 = arith.constant 1.000000e+01 : f32
    %50 = vector.broadcast %cst_13 : f32 to vector<1x128xf32>
    %51 = arith.mulf %49, %50 : vector<1x128xf32>
    %52 = arith.mulf %26, %12 : vector<1x128xf32>
    %53 = math.log %52 : vector<1x128xf32>
    %cst_14 = arith.constant 0.000000e+00 : f32
    %54 = vector.broadcast %cst_14 : f32 to vector<1x128xf32>
    %55 = arith.subf %53, %54 : vector<1x128xf32>
    %cst_15 = arith.constant 5.000000e+00 : f32
    %56 = vector.broadcast %cst_15 : f32 to vector<1x128xf32>
    %57 = arith.mulf %55, %56 : vector<1x128xf32>
    %58 = arith.mulf %31, %13 : vector<1x128xf32>
    %59 = math.log %58 : vector<1x128xf32>
    %cst_16 = arith.constant 0.000000e+00 : f32
    %60 = vector.broadcast %cst_16 : f32 to vector<1x128xf32>
    %61 = arith.subf %59, %60 : vector<1x128xf32>
    %cst_17 = arith.constant 5.000000e+00 : f32
    %62 = vector.broadcast %cst_17 : f32 to vector<1x128xf32>
    %63 = arith.mulf %61, %62 : vector<1x128xf32>
    %64 = tpu.concatenate %45, %51, %57, %63 in 0 : vector<1x128xf32>, vector<1x128xf32>, vector<1x128xf32>, vector<1x128xf32> -> vector<4x128xf32>
    %c0_18 = arith.constant 0 : index
    %c0_19 = arith.constant 0 : index
    %65 = vector.load %arg2[%c0_18, %c0_19] : memref<1x128xf32, #tpu.memory_space<vmem>>, vector<1x128xf32>
    %cst_20 = arith.constant 0.000000e+00 : f32
    %66 = vector.broadcast %cst_20 : f32 to vector<1x128xf32>
    %67 = arith.cmpf ogt, %65, %66 : vector<1x128xf32>
    %cst_21 = arith.constant 0.000000e+00 : f32
    %68 = vector.shape_cast %67 : vector<1x128xi1> to vector<1x128xi1>
    %69 = vector.broadcast %68 : vector<1x128xi1> to vector<4x128xi1>
    %70 = vector.broadcast %cst_21 : f32 to vector<4x128xf32>
    %71 = arith.select %69, %64, %70 : vector<4x128xi1>, vector<4x128xf32>
    %c0_22 = arith.constant 0 : index
    %c0_23 = arith.constant 0 : index
    %72 = vector.load %arg3[%c0_22, %c0_23] : memref<4x128xf32, #tpu.memory_space<vmem>>, vector<4x128xf32>
    tpu.vector_store %arg3[%c0_22, %c0_23], %71 {strides = array<i32>} : memref<4x128xf32, #tpu.memory_space<vmem>>, vector<4x128xf32>,
    return
  }
}

</mosaic_0001>

<llo_original>
// kernel: _forward_impl.2
$region0: #{_forward_impl.2}
  #allocation0 [shape = 'u32[]', space=smem, size = 0x4, offset = 0x4, fixed_abs, tag = 'smem constant byte address 0x4 - core index']
  #allocation1 [shape = 'u32[144,128]{1,0:T(1,128)}', space=vmem, size = 0x12000, scoped, tag = 'internal scratch']
  %s0 = inlined_call_operand.vmem [shape: f32[2,4,128], index: 0, kind: input, shape index: {}]
  %s1 = inlined_call_operand.vmem [shape: f32[2,4,5], index: 1, kind: input, shape index: {}]
  %s2 = inlined_call_operand.vmem [shape: f32[2,8,128], index: 2, kind: output, shape index: {}]
  %s3 = sld [smem:[#allocation0]]
  $region41: #{_forward_impl.2} parent=0
    _
  %s5 = ssub.s32 1, %s3
  %s6 = scalar_select 0, %s5, %s3
  loop: start=0, step=1, limit=4
  $region2: #{_forward_impl.2} parent=0 // loop_pre_header
    _
  $region3: #{_forward_impl.2} parent=0 // loop_header
    %s8 = sphi 0, %s12
    %p9 = scmp.ge.s32.totalorder %s8, 4
    %s15 = sphi 0, %s27
    %s16 = sphi 0, %s23
    %s17 = sphi 0, %s15
    %s18 = sphi 0, %s16
    %s19 = sphi 0, %s17
    %s20 = sphi 0, %s18
    %s32 = sphi 0, %s34
    %s35 = sphi 0, %s32
    %s36 = sphi 0, %s35
    %s52 = sphi 0, %s36
    %s58 = sphi 0, %s60
    %s61 = sphi 0, %s58
    %s62 = sphi 0, %s61
    %s78 = sphi 0, %s62
    %s86 = sphi 0, %s88
    %s89 = sphi 0, %s86
    %s90 = sphi 0, %s89
    %s106 = sphi 0, %s90
  $region4: #{_forward_impl.2} parent=0 // loop_header_branch
    %11 = sbr.rel (%p9) target = $region8
  $region5: #{_forward_impl.2} parent=0 // loop_body
    %s13 = ssub.s32 %s8, 1
    %s14 = ssub.s32 %s8, 2
    %s21 = sadd.s32 1, %s16
    %p22 = scmp.ge.s32.totalorder %s21, 1
    %s23 = scalar_select %p22, 0, %s21
    %s24 = sadd.s32 1, %s15
    %s25 = scalar_select %p22, %s24, %s15
    %p26 = scmp.ge.s32.totalorder %s25, 2
    %s27 = scalar_select %p26, 0, %s25
    %s28 = ssub.s32 %s15, %s27
    %s29 = ssub.s32 %s16, %s23
    %s30 = sor.u32 %s28, %s29
    %p31 = scmp.eq.s32.totalorder %s30, 0
    %s33 = sadd.s32 %s32, 1
    %s34 = scalar_select %p31, %s32, %s33
    %p37 = pneg %p31
    %p38 = scmp.eq.s32.totalorder %s8, 1
    %p39 = por %p37, %p38
    %p40 = scmp.ne.s32.totalorder %s32, %s35
    %p41 = scmp.eq.s32.totalorder %s8, 0
    %p42 = por %p40, %p41
    %p43 = scmp.ne.s32.totalorder %s32, %s35
    %p44 = scmp.eq.s32.totalorder %s13, 1
    %p45 = por %p43, %p44
    %p46 = scmp.ne.s32.totalorder %s35, %s36
    %p47 = scmp.eq.s32.totalorder %s13, 0
    %p48 = por %p46, %p47
    %p49 = scmp.ne.s32.totalorder %s35, %s36
    %p50 = scmp.eq.s32.totalorder %s14, 1
    %p51 = por %p49, %p50
    %p53 = scmp.ne.s32.totalorder %s36, %s52
    %p54 = scmp.eq.s32.totalorder %s14, 0
    %p55 = por %p53, %p54
    %s56 = ssub.s32 %s15, %s27
    %p57 = scmp.eq.s32.totalorder %s56, 0
    %s59 = sadd.s32 %s58, 1
    %s60 = scalar_select %p57, %s58, %s59
    %p63 = pneg %p57
    %p64 = scmp.eq.s32.totalorder %s8, 1
    %p65 = por %p63, %p64
    %p66 = scmp.ne.s32.totalorder %s58, %s61
    %p67 = scmp.eq.s32.totalorder %s8, 0
    %p68 = por %p66, %p67
    %p69 = scmp.ne.s32.totalorder %s58, %s61
    %p70 = scmp.eq.s32.totalorder %s13, 1
    %p71 = por %p69, %p70
    %p72 = scmp.ne.s32.totalorder %s61, %s62
    %p73 = scmp.eq.s32.totalorder %s13, 0
    %p74 = por %p72, %p73
    %p75 = scmp.ne.s32.totalorder %s61, %s62
    %p76 = scmp.eq.s32.totalorder %s14, 1
    %p77 = por %p75, %p76
    %p79 = scmp.ne.s32.totalorder %s62, %s78
    %p80 = scmp.eq.s32.totalorder %s14, 0
    %p81 = por %p79, %p80
    %s82 = ssub.s32 %s15, %s27
    %s83 = ssub.s32 %s16, %s23
    %s84 = sor.u32 %s82, %s83
    %p85 = scmp.eq.s32.totalorder %s84, 0
    %s87 = sadd.s32 %s86, 1
    %s88 = scalar_select %p85, %s86, %s87
    %p91 = pneg %p85
    %p92 = scmp.eq.s32.totalorder %s8, 1
    %p93 = por %p91, %p92
    %p94 = scmp.ne.s32.totalorder %s86, %s89
    %p95 = scmp.eq.s32.totalorder %s8, 0
    %p96 = por %p94, %p95
    %p97 = scmp.ne.s32.totalorder %s86, %s89
    %p98 = scmp.eq.s32.totalorder %s13, 1
    %p99 = por %p97, %p98
    %p100 = scmp.ne.s32.totalorder %s89, %s90
    %p101 = scmp.eq.s32.totalorder %s13, 0
    %p102 = por %p100, %p101
    %p103 = scmp.ne.s32.totalorder %s89, %s90
    %p104 = scmp.eq.s32.totalorder %s14, 1
    %p105 = por %p103, %p104
    %p107 = scmp.ne.s32.totalorder %s90, %s106
    %p108 = scmp.eq.s32.totalorder %s14, 0
    %p109 = por %p107, %p108
    %p110 = scmp.le.s32.totalorder 1, %s8
    %p111 = scmp.lt.s32.totalorder %s8, 3
    %p112 = pnand %p110, %p111
    %p113 = pneg %p112
    // Predicated region
    $region9: #{_forward_impl.2} parent=5 // pred_check
      _
    $region10: #{_forward_impl.2} parent=5 // pred_check_branch
      %115 = sbr.rel (%p112) target = $region12
    $region11: #{_forward_impl.2} parent=5 // pred_region
      %s116 = ssub.s32 %s8, 1
    $region12: #{_forward_impl.2} parent=5 // pred_fallthru
      _
    %p117 = scmp.lt.s32.totalorder %s8, 2
    // Predicated region
    $region13: #{_forward_impl.2} parent=5 // pred_check
      %p118 = pneg %p117
    $region14: #{_forward_impl.2} parent=5 // pred_check_branch
      %120 = sbr.rel (%p118) target = $region16
    $region15: #{_forward_impl.2} parent=5 // pred_region
      // Predicated region
      $region17: #{_forward_impl.2} parent=15 // pred_check
        %p121 = pneg %p42
      $region18: #{_forward_impl.2} parent=15 // pred_check_branch
        %123 = sbr.rel (%p121) target = $region20
      $region19: #{_forward_impl.2} parent=15 // pred_region
        %p124 = scmp.lt.s32.totalorder %s15, 1
        %s125 = scalar_select %p124, %s15, 1
        %p126 = scmp.lt.s32.totalorder %s16, 0
        %s127 = scalar_select %p126, %s16, 0
        %s128 = sadd.s32 %s127, %s125
        %s129 = smul.addr %s128, 4
        %s130 = scalar_lea.vmem %s0, %s129
      $region20: #{_forward_impl.2} parent=15 // pred_fallthru
        _
      // Predicated region
      $region21: #{_forward_impl.2} parent=15 // pred_check
        %p131 = pneg %p68
      $region22: #{_forward_impl.2} parent=15 // pred_check_branch
        %133 = sbr.rel (%p131) target = $region24
      $region23: #{_forward_impl.2} parent=15 // pred_region
        %p134 = scmp.lt.s32.totalorder %s15, 1
        %s135 = scalar_select %p134, %s15, 1
        %s136 = smul.addr %s135, 4
        %s137 = scalar_lea.vmem %s1, %s136
      $region24: #{_forward_impl.2} parent=15 // pred_fallthru
        _
    $region16: #{_forward_impl.2} parent=5 // pred_fallthru
      _
    %p138 = scmp.le.s32.totalorder 1, %s8
    %p139 = scmp.lt.s32.totalorder %s8, 3
    %p140 = pnand %p138, %p139
    %p141 = pneg %p140
    // Predicated region
    $region25: #{_forward_impl.2} parent=5 // pred_check
      _
    $region26: #{_forward_impl.2} parent=5 // pred_check_branch
      %143 = sbr.rel (%p140) target = $region28
    $region27: #{_forward_impl.2} parent=5 // pred_region
      %s144 = ssub.s32 %s8, 1
      %p145 = scmp.lt.s32.totalorder %s17, 1
      %s146 = scalar_select %p145, %s17, 1
      %p147 = scmp.lt.s32.totalorder %s18, 0
      %s148 = scalar_select %p147, %s18, 0
      %s149 = sadd.s32 %s148, %s146
      %s150 = smul.addr %s149, 4
      %s151 = scalar_lea.vmem %s0, %s150
      %p152 = pneg %p48
      %p153 = pneg %p45
      %p154 = scmp.lt.s32.totalorder %s17, 1
      %s155 = scalar_select %p154, %s17, 1
      %s156 = smul.addr %s155, 4
      %s157 = scalar_lea.vmem %s1, %s156
      %p158 = pneg %p74
      %p159 = pneg %p71
      %p160 = pneg %p102
      %p161 = pneg %p99
      %p162 = scmp.lt.s32.totalorder %s17, 1
      %s163 = scalar_select %p162, %s17, 1
      %p164 = scmp.lt.s32.totalorder %s18, 0
      %s165 = scalar_select %p164, %s18, 0
      %s166 = sadd.s32 %s165, %s163
      %s167 = smul.addr %s166, 8
      %s168 = scalar_lea.vmem %s2, %s167
      %p169 = scmp.lt.s32.totalorder %s17, 1
      %s170 = scalar_select %p169, %s17, 1
      %p171 = scmp.lt.s32.totalorder %s18, 0
      %s172 = scalar_select %p171, %s18, 0
      %s173 = sadd.s32 %s172, %s170
      %s174 = smul.addr %s173, 4
      %s175 = scalar_lea.vmem %s0, %s174
      %p176 = scmp.lt.s32.totalorder %s17, 1
      %s177 = scalar_select %p176, %s17, 1
      %s178 = smul.addr %s177, 4
      %s179 = scalar_lea.vmem %s1, %s178
      %p180 = scmp.lt.s32.totalorder %s17, 1
      %s181 = scalar_select %p180, %s17, 1
      %p182 = scmp.lt.s32.totalorder %s18, 0
      %s183 = scalar_select %p182, %s18, 0
      %s184 = sadd.s32 %s183, %s181
      %s185 = smul.addr %s184, 8
      %s186 = scalar_lea.vmem %s2, %s185
      %v187 = vld [vmem:[%s175] sm:$0xf]
      %v188 = vld [vmem:[%s179] sm:$0xf]
      %v190 = vrot.slane %v187, 6
      %v192 = vsub.f32 %v187, %v190
      %v193 = vadd.f32 %v192, 1.0
      %195 = vrot.lane.b32.xlu0 %v188, 2
      %v196 = vpop.permute.xlu0 %195
      %v198 = vsub.f32 %v188, %v196
      %v199 = vadd.f32 %v198, 1.0
      %v201 = vrot.slane %v193, 1
      %v203 = vmul.f32 %v193, %v201
      %205 = vrot.lane.b32.xlu0 %v199, 127
      %v206 = vpop.permute.xlu0 %205
      %v208 = vmul.f32 %v199, %v206
      %v209 = vlaneseq
      %v210 = vshrl.u32 %v209, 7
      %v211 = vsub.s32 2, %v210
      %v212 = vrot.slane %v187, %v211
      %213 = vset.pattern.permute.xlu0 2
      %214 = vperm.xlu0 %213, %v188
      %v215 = vpop.permute.xlu0 %214
      %v217 = vmin.f32 %v212, %v215
      %v218 = vlaneseq
      %v219 = vshrl.u32 %v218, 7
      %v220 = vsub.s32 0, %v219
      %v221 = vrot.slane %v187, %v220
      %222 = vset.pattern.permute.xlu0 0
      %223 = vperm.xlu0 %222, %v188
      %v224 = vpop.permute.xlu0 %223
      %v226 = vmax.f32 %v221, %v224
      %v227 = vsub.f32 %v217, %v226
      %v228 = vadd.f32 %v227, 1.0
      %v229 = vmax.f32 %v228, 0.0
      %v230 = vlaneseq
      %v231 = vshrl.u32 %v230, 7
      %v232 = vsub.s32 3, %v231
      %v233 = vrot.slane %v187, %v232
      %234 = vset.pattern.permute.xlu0 3
      %235 = vperm.xlu0 %234, %v188
      %v236 = vpop.permute.xlu0 %235
      %v238 = vmin.f32 %v233, %v236
      %v239 = vlaneseq
      %v240 = vshrl.u32 %v239, 7
      %v241 = vsub.s32 1, %v240
      %v242 = vrot.slane %v187, %v241
      %243 = vset.pattern.permute.xlu0 1
      %244 = vperm.xlu0 %243, %v188
      %v245 = vpop.permute.xlu0 %244
      %v247 = vmax.f32 %v242, %v245
      %v248 = vsub.f32 %v238, %v247
      %v249 = vadd.f32 %v248, 1.0
      %v250 = vmax.f32 %v249, 0.0
      %v251 = vmul.f32 %v229, %v250
      %v252 = vlaneseq
      %v253 = vshrl.u32 %v252, 7
      %v254 = vsub.s32 2, %v253
      %v255 = vrot.slane %v203, %v254
      %257 = vset.pattern.permute.xlu0 2
      %258 = vperm.xlu0 %257, %v208
      %v259 = vpop.permute.xlu0 %258
      %v261 = vadd.f32 %v255, %v259
      %v262 = vsub.f32 %v261, %v251
      %v263 = vmax.f32 %v262, 1.0
      %v264 = vrcp.pop %v263
      %v265 = vmul.f32 %v251, %v264
      %vm266 = vcmp.eq.f32.partialorder %v199, 1.0
      %v267 = vsel %vm266, 1, 0
      %268 = vrot.lane.b32.xlu0 %v267, 127
      %v269 = vpop.permute.xlu0 %268
      %vm270 = vcmp.ne.s32.totalorder %v269, 0
      %vm271 = vmand %vm266, %vm270
      %vm272 = vcmp.eq.f32.partialorder %v193, 1.0
      %v273 = vsel %vm272, 1, 0
      %v274 = vrot.slane %v273, 1
      %vm275 = vcmp.ne.s32.totalorder %v274, 0
      %vm276 = vmand %vm272, %vm275
      %v277 = vsel %vm271, 1, 0
      %278 = vset.pattern.permute.xlu0 2
      %279 = vperm.xlu0 %278, %v277
      %v280 = vpop.permute.xlu0 %279
      %vm281 = vcmp.eq.s32.totalorder %v280, 1
      %v282 = vsel %vm281, 0.0, %v265
      %v283 = vsel %vm276, 1, 0
      %v284 = vlaneseq
      %v285 = vshrl.u32 %v284, 7
      %v286 = vsub.s32 2, %v285
      %v287 = vrot.slane %v283, %v286
      %vm288 = vcmp.eq.s32.totalorder %v287, 1
      %v289 = vsel %vm288, -1.0, %v282
      %vm290 = vcmask 1043456
      %v291 = vsel %vm290, %v289, -inf
      %v292 = vrot.slane %v291, 4
      %v293 = vmax.f32 %v291, %v292
      %v294 = vrot.slane %v293, 2
      %v295 = vmax.f32 %v293, %v294
      %v296 = vrot.slane %v295, 1
      %v297 = vmax.f32 %v295, %v296
      %v298 = vlaneseq
      %v299 = vshrl.u32 %v298, 7
      %vm300 = vcmp.eq.f32.partialorder %v289, %v297
      %v301 = vsel %vm300, %v299, 4
      %v302 = vsel %vm290, %v301, 2147483647
      %v303 = vrot.slane %v302, 4
      %vm304 = vcmp.lt.s32.totalorder %v302, %v303
      %v305 = vsel %vm304, %v302, %v303
      %v306 = vrot.slane %v305, 2
      %vm307 = vcmp.lt.s32.totalorder %v305, %v306
      %v308 = vsel %vm307, %v305, %v306
      %v309 = vrot.slane %v308, 1
      %vm310 = vcmp.lt.s32.totalorder %v308, %v309
      %v311 = vsel %vm310, %v308, %v309
      %vm312 = vcmp.eq.s32.totalorder %v299, %v311
      %v313 = vsel %vm312, 1, 0
      %v314 = vcvt.s32.f32 %v313
      %315 = vset.pattern.permute.xlu0 4
      %316 = vperm.xlu0 %315, %v188
      %v317 = vpop.permute.xlu0 %316
      %v319 = vmul.f32 %v314, %v317
      %v320 = vsel %vm290, %v319, 0.0
      %v321 = vrot.slane %v320, 4
      %v322 = vadd.f32 %v320, %v321
      %v323 = vrot.slane %v322, 2
      %v324 = vadd.f32 %v322, %v323
      %v325 = vrot.slane %v324, 1
      %v326 = vadd.f32 %v324, %v325
      %v327 = vmul.f32 %v314, %v224
      %v328 = vsel %vm290, %v327, 0.0
      %v329 = vrot.slane %v328, 4
      %v330 = vadd.f32 %v328, %v329
      %v331 = vrot.slane %v330, 2
      %v332 = vadd.f32 %v330, %v331
      %v333 = vrot.slane %v332, 1
      %v334 = vadd.f32 %v332, %v333
      %v335 = vmul.f32 %v314, %v245
      %v336 = vsel %vm290, %v335, 0.0
      %v337 = vrot.slane %v336, 4
      %v338 = vadd.f32 %v336, %v337
      %v339 = vrot.slane %v338, 2
      %v340 = vadd.f32 %v338, %v339
      %v341 = vrot.slane %v340, 1
      %v342 = vadd.f32 %v340, %v341
      %v343 = vmul.f32 %v314, %v215
      %v344 = vsel %vm290, %v343, 0.0
      %v345 = vrot.slane %v344, 4
      %v346 = vadd.f32 %v344, %v345
      %v347 = vrot.slane %v346, 2
      %v348 = vadd.f32 %v346, %v347
      %v349 = vrot.slane %v348, 1
      %v350 = vadd.f32 %v348, %v349
      %v351 = vmul.f32 %v314, %v236
      %v352 = vsel %vm290, %v351, 0.0
      %v353 = vrot.slane %v352, 4
      %v354 = vadd.f32 %v352, %v353
      %v355 = vrot.slane %v354, 2
      %v356 = vadd.f32 %v354, %v355
      %v357 = vrot.slane %v356, 1
      %v358 = vadd.f32 %v356, %v357
      %vm359 = vcmask 1040384
      %v360 = vsel %vm359, %v297, %v326
      %vm361 = vcmask 1041408
      %v362 = vsel %vm361, %v360, %v334
      %vm363 = vcmask 1042432
      %v364 = vsel %vm363, %v362, %v342
      %v365 = vsel %vm290, %v364, %v350
      %vm366 = vcmask 1044480
      %v367 = vsel %vm366, %v365, %v358
      %vm368 = vcmask 1045504
      %v369 = vsel %vm368, %v367, 0.0
      %vm370 = vcmask 1046528
      %v371 = vsel %vm370, %v369, 0.0
      %372 = vst [vmem:[%s186] sm:$0xff] %v371
      %p373 = scmp.lt.s32.totalorder %s17, 1
      %s374 = scalar_select %p373, %s17, 1
      %p375 = scmp.lt.s32.totalorder %s18, 0
      %s376 = scalar_select %p375, %s18, 0
      %s377 = sadd.s32 %s376, %s374
      %s378 = smul.addr %s377, 8
      %s379 = scalar_lea.vmem %s2, %s378
      // Predicated region
      $region29: #{_forward_impl.2} parent=27 // pred_check
        %p380 = pneg %p99
      $region30: #{_forward_impl.2} parent=27 // pred_check_branch
        %382 = sbr.rel (%p380) target = $region32
      $region31: #{_forward_impl.2} parent=27 // pred_region
        _
      $region32: #{_forward_impl.2} parent=27 // pred_fallthru
        _
    $region28: #{_forward_impl.2} parent=5 // pred_fallthru
      _
    %p383 = scmp.le.s32.totalorder 2, %s8
    // Predicated region
    $region33: #{_forward_impl.2} parent=5 // pred_check
      %p384 = pneg %p383
    $region34: #{_forward_impl.2} parent=5 // pred_check_branch
      %386 = sbr.rel (%p384) target = $region36
    $region35: #{_forward_impl.2} parent=5 // pred_region
      %s387 = ssub.s32 %s8, 2
      // Predicated region
      $region37: #{_forward_impl.2} parent=35 // pred_check
        %p388 = pneg %p105
      $region38: #{_forward_impl.2} parent=35 // pred_check_branch
        %390 = sbr.rel (%p388) target = $region40
      $region39: #{_forward_impl.2} parent=35 // pred_region
        %p391 = scmp.lt.s32.totalorder %s19, 1
        %s392 = scalar_select %p391, %s19, 1
        %p393 = scmp.lt.s32.totalorder %s20, 0
        %s394 = scalar_select %p393, %s20, 0
        %s395 = sadd.s32 %s394, %s392
        %s396 = smul.addr %s395, 8
        %s397 = scalar_lea.vmem %s2, %s396
      $region40: #{_forward_impl.2} parent=35 // pred_fallthru
        _
    $region36: #{_forward_impl.2} parent=5 // pred_fallthru
      _
  $region6: #{_forward_impl.2} parent=0 // loop_footer
    %s12 = sadd.s32 1, %s8
  $region7: #{_forward_impl.2} parent=0 // loop_footer_branch
    %7 = sbr.rel target = $region3
  $region8: #{_forward_impl.2} parent=0 // loop_exit
    _

// kernel: _forward_impl.3
$region0: #{_forward_impl.3}
  #allocation0 [shape = 'u32[]', space=smem, size = 0x4, offset = 0x4, fixed_abs, tag = 'smem constant byte address 0x4 - core index']
  #allocation1 [shape = 'u32[144,128]{1,0:T(1,128)}', space=vmem, size = 0x12000, scoped, tag = 'internal scratch']
  %s0 = inlined_call_operand.vmem [shape: f32[4,128], index: 0, kind: input, shape index: {}]
  %s1 = inlined_call_operand.vmem [shape: f32[4,128], index: 1, kind: input, shape index: {}]
  %s2 = inlined_call_operand.vmem [shape: f32[1,128], index: 2, kind: input, shape index: {}]
  %s3 = inlined_call_operand.vmem [shape: f32[4,128], index: 3, kind: output, shape index: {}]
  %s4 = sld [smem:[#allocation0]]
  $region22: #{_forward_impl.3} parent=0
    _
  %s6 = ssub.s32 1, %s4
  %s7 = scalar_select 0, %s6, %s4
  // Predicated region
  $region2: #{_forward_impl.3} parent=0 // pred_check
    _
  $region3: #{_forward_impl.3} parent=0 // pred_check_branch
    %9 = sbr.rel (0) target = $region5
  $region4: #{_forward_impl.3} parent=0 // pred_region
    _
  $region5: #{_forward_impl.3} parent=0 // pred_fallthru
    _
  // Predicated region
  $region6: #{_forward_impl.3} parent=0 // pred_check
    _
  $region7: #{_forward_impl.3} parent=0 // pred_check_branch
    %11 = sbr.rel (0) target = $region9
  $region8: #{_forward_impl.3} parent=0 // pred_region
    _
  $region9: #{_forward_impl.3} parent=0 // pred_fallthru
    _
  // Predicated region
  $region10: #{_forward_impl.3} parent=0 // pred_check
    _
  $region11: #{_forward_impl.3} parent=0 // pred_check_branch
    %13 = sbr.rel (0) target = $region13
  $region12: #{_forward_impl.3} parent=0 // pred_region
    _
  $region13: #{_forward_impl.3} parent=0 // pred_fallthru
    _
  %v14 = vld [vmem:[%s0] sm:$0xf]
  %v15 = vld [vmem:[%s1] sm:$0xf]
  %v17 = vrot.slane %v14, 6
  %v19 = vsub.f32 %v14, %v17
  %v20 = vadd.f32 %v19, 1.0
  %v21 = vrcp.pop %v20
  %v22 = vmul.f32 %v20, 0.5
  %v24 = vrot.slane %v22, 2
  %v26 = vadd.f32 %v14, %v24
  %v28 = vrot.slane %v15, 6
  %v30 = vsub.f32 %v15, %v28
  %v31 = vadd.f32 %v30, 1.0
  %v32 = vmul.f32 %v31, 0.5
  %v34 = vrot.slane %v32, 2
  %v36 = vadd.f32 %v15, %v34
  %v37 = vsub.f32 %v36, %v26
  %v39 = vrot.slane %v21, 2
  %v41 = vmul.f32 %v37, %v39
  %v42 = vmul.f32 %v41, 10.0
  %v43 = vmul.f32 %v31, %v21
  %v44 = vlog2.pop %v43
  %v45 = vmul.f32 %v44, 0.6931472
  %v46 = vmul.f32 %v45, 5.0
  %vm47 = vcmask 1041408
  %v48 = vsel %vm47, %v42, %v46
  %vm49 = vcmask 1042432
  %v50 = vsel %vm49, %v48, %v46
  %v51 = vld [vmem:[%s2] sm:$0x1]
  %vm52 = vcmp.gt.f32.partialorder %v51, 0.0
  %v53 = vsel %vm52, 1, 0
  %v54 = vlaneseq
  %v55 = vshrl.u32 %v54, 7
  %v56 = vsub.s32 0, %v55
  %v57 = vrot.slane %v53, %v56
  %vm58 = vcmp.eq.s32.totalorder %v57, 1
  %v59 = vsel %vm58, %v50, 0.0
  %60 = vst [vmem:[%s3] sm:$0xf] %v59
  // Predicated region
  $region14: #{_forward_impl.3} parent=0 // pred_check
    _
  $region15: #{_forward_impl.3} parent=0 // pred_check_branch
    %62 = sbr.rel (0) target = $region17
  $region16: #{_forward_impl.3} parent=0 // pred_region
    _
  $region17: #{_forward_impl.3} parent=0 // pred_fallthru
    _
  // Predicated region
  $region18: #{_forward_impl.3} parent=0 // pred_check
    _
  $region19: #{_forward_impl.3} parent=0 // pred_check_branch
    %64 = sbr.rel (0) target = $region21
  $region20: #{_forward_impl.3} parent=0 // pred_region
    _
  $region21: #{_forward_impl.3} parent=0 // pred_fallthru
    _

</llo_original>
